<compile_context>
chip_gen: v7x
topology: tpu7x:2x2x1
jax: 0.10.0
libtpu: 0.0.40
codegen_flags: <defaults>
</compile_context>

<pallas_src>
import jax
import jax.numpy as jnp
from jax.experimental import pallas as pl
from jax.experimental.pallas import tpu as pltpu

# ---------------- configuration (mirrors NewCouplingBlock.__init__ defaults) --------
X1_FACTOR = 1.0
X2_FACTOR = 1.0
SWITCH = False
# fix_random_seed only affects training-time RNG bookkeeping, not forward math.

B, S, D = 2, 8, 128        # x has shape (B, S, 2*D); 2*D = 256 keeps 128-lane alignment
TM_DEFAULT = 512           # row tile for real workloads; clamped for tiny inputs
MXU_DTYPE = jnp.bfloat16   # bf16 MXU path on v5e/v6e/v7x; accumulation stays f32
ACT_DTYPE = jnp.bfloat16   # bf16 activation I/O (HBM-bound kernel: halves bytes moved)


def _round_up(a: int, b: int) -> int:
    return (a + b - 1) // b * b


def _coupling_kernel(x_ref, wf_ref, bf_ref, wg_ref, bg_ref, y_ref):
    """One (TM, 2*D) row-tile of the coupling block.

    x_ref : (TM, 2*D) act dtype    y_ref : (TM, 2*D) act dtype
    wf/wg : (D, D)    bf16         bf/bg : (1, D)    f32
    """
    d = wf_ref.shape[0]
    x1 = x_ref[:, :d]                       # (TM, D), 128-lane aligned slice
    x2 = x_ref[:, d:]                       # (TM, D)

    # F(X_2) = GELU(X_2 @ Wf + bf)   — bf16 MXU, f32 accumulate, f32 elementwise
    f = jnp.dot(x2.astype(wf_ref.dtype), wf_ref[...],
                preferred_element_type=jnp.float32) + bf_ref[...]
    f = jax.nn.gelu(f, approximate=True)    # tanh GELU (F/G are arbitrary stand-ins)
    if X1_FACTOR == 1.0:                    # trace-time guard: skip *1.0
        y1 = x1.astype(jnp.float32) + f
    else:
        y1 = jnp.float32(X1_FACTOR) * x1.astype(jnp.float32) + f

    # Write the Y_1 half immediately so x1/f temporaries retire before the G matmul
    # (VMEM headroom at large TM, esp. on v7x's 64 MiB VMEM).
    if SWITCH:
        y_ref[:, d:] = y1.astype(y_ref.dtype)
    else:
        y_ref[:, :d] = y1.astype(y_ref.dtype)

    # G(Y_1) = GELU(Y_1 @ Wg + bg)
    g = jnp.dot(y1.astype(wg_ref.dtype), wg_ref[...],
                preferred_element_type=jnp.float32) + bg_ref[...]
    g = jax.nn.gelu(g, approximate=True)
    if X2_FACTOR == 1.0:
        y2 = x2.astype(jnp.float32) + g
    else:
        y2 = jnp.float32(X2_FACTOR) * x2.astype(jnp.float32) + g

    if SWITCH:
        y_ref[:, :d] = y2.astype(y_ref.dtype)
    else:
        y_ref[:, d:] = y2.astype(y_ref.dtype)


def prepare_coupling_params(wf, bf, wg, bg):
    """One-time parameter prep (bf16 weights, (1, D) f32 biases).

    Done once at setup so coupling_block_forward emits no per-call cast/reshape ops.
    """
    d = wf.shape[0]
    return (wf.astype(MXU_DTYPE),
            bf.reshape(1, d).astype(jnp.float32),
            wg.astype(MXU_DTYPE),
            bg.reshape(1, d).astype(jnp.float32))


def coupling_block_forward(x, wf_b, bf2, wg_b, bg2, *, tm=TM_DEFAULT):
    """x: (B, S, 2*D) -> (B, S, 2*D), same dtype as x (bf16 or f32)."""
    b, s, two_d = x.shape
    d = two_d // 2
    m = b * s

    # Clamp tile: multiple of 8 sublanes, and small enough that the grid has >= 2
    # iterations when possible (so "parallel" shards across both TCs on v7x).
    tm = max(8, min(tm, _round_up(pl.cdiv(m, 2), 8)))
    grid = (pl.cdiv(m, tm),)                # ragged last tile masked by Pallas; no pad/slice

    x2d = x.reshape(m, two_d)               # contiguous: free reshape, no split

    row_spec = pl.BlockSpec((tm, two_d), lambda i: (i, 0))
    w_spec = pl.BlockSpec((d, d), lambda i: (0, 0))
    b_spec = pl.BlockSpec((1, d), lambda i: (0, 0))

    y = pl.pallas_call(
        _coupling_kernel,
        grid=grid,
        in_specs=[row_spec, w_spec, b_spec, w_spec, b_spec],
        out_specs=row_spec,
        out_shape=jax.ShapeDtypeStruct((m, two_d), x.dtype),
        compiler_params=pltpu.CompilerParams(
            dimension_semantics=("parallel",),   # shards row tiles across TCs on v7x
            # default scoped VMEM limit is ample: ~1 MiB double-buffered at TM=512
        ),
    )(x2d, wf_b, bf2, wg_b, bg2)

    return y.reshape(b, s, two_d)


def _reference(x, wf_b, bf2, wg_b, bg2):
    """Pure-JAX reference with the same bf16-matmul / f32-elementwise recipe."""
    d = x.shape[-1] // 2
    x1, x2 = x[..., :d].astype(jnp.float32), x[..., d:].astype(jnp.float32)
    f = jnp.dot(x2.astype(MXU_DTYPE), wf_b,
                preferred_element_type=jnp.float32) + bf2[0]
    f = jax.nn.gelu(f, approximate=True)
    y1 = X1_FACTOR * x1 + f
    g = jnp.dot(y1.astype(MXU_DTYPE), wg_b,
                preferred_element_type=jnp.float32) + bg2[0]
    g = jax.nn.gelu(g, approximate=True)
    y2 = X2_FACTOR * x2 + g
    if SWITCH:
        out = jnp.concatenate([y2, y1], axis=-1)
    else:
        out = jnp.concatenate([y1, y2], axis=-1)
    return out.astype(x.dtype)


if __name__ == "__main__":
    key = jax.random.PRNGKey(0)
    kx, kwf, kbf, kwg, kbg = jax.random.split(key, 5)

    # deterministic parameter init for the F and G stand-ins (Linear(D, D) + GELU)
    wf = jax.random.normal(kwf, (D, D), dtype=jnp.float32) * (1.0 / jnp.sqrt(D))
    bf = jax.random.normal(kbf, (D,), dtype=jnp.float32) * 0.01
    wg = jax.random.normal(kwg, (D, D), dtype=jnp.float32) * (1.0 / jnp.sqrt(D))
    bg = jax.random.normal(kbg, (D,), dtype=jnp.float32) * 0.01
    params = prepare_coupling_params(wf, bf, wg, bg)   # one-time prep, reused per call

    # Primary path: bf16 activation I/O (halves HBM traffic for this HBM-bound kernel).
    x_bf16 = jax.random.normal(kx, (B, S, 2 * D), dtype=jnp.float32).astype(ACT_DTYPE)
    out = coupling_block_forward(x_bf16, *params)
    out = jax.block_until_ready(out)
    ref = _reference(x_bf16, *params)
    assert out.shape == (B, S, 2 * D) and out.dtype == ACT_DTYPE
    assert jnp.allclose(out.astype(jnp.float32), ref.astype(jnp.float32),
                        atol=2e-2, rtol=2e-2), (
        f"max abs err {jnp.max(jnp.abs(out.astype(jnp.float32) - ref.astype(jnp.float32)))}")

    # Secondary sanity check: the wrapper also accepts f32 activations unchanged.
    x_f32 = x_bf16.astype(jnp.float32)
    out_f32 = jax.block_until_ready(coupling_block_forward(x_f32, *params))
    ref_f32 = _reference(x_f32, *params)
    assert out_f32.dtype == jnp.float32
    assert jnp.allclose(out_f32, ref_f32, atol=2e-2, rtol=2e-2), (
        f"max abs err {jnp.max(jnp.abs(out_f32 - ref_f32))}")

    print("KERNEL_OK")
</pallas_src>

<mosaic_0001>
module attributes {stable_mosaic.version = 11 : i64} {
  func.func @_coupling_kernel(%arg0: i32, %arg1: memref<8x256xbf16, #tpu.memory_space<vmem>>, %arg2: memref<128x128xbf16, #tpu.memory_space<vmem>>, %arg3: memref<1x128xf32, #tpu.memory_space<vmem>>, %arg4: memref<128x128xbf16, #tpu.memory_space<vmem>>, %arg5: memref<1x128xf32, #tpu.memory_space<vmem>>, %arg6: memref<8x256xbf16, #tpu.memory_space<vmem>>) attributes {dimension_semantics = [#tpu.dimension_semantics<parallel>], iteration_bounds = array<i64: 2>, scalar_prefetch = 0 : i64, scratch_operands = 0 : i64, tpu.core_type = #tpu.core_type<tc>, window_params = [{transform_indices = @transform_0, window_bounds = array<i64: 8, 256>}, {pipeline_mode = #tpu.pipeline_mode<synchronous>, transform_indices = @transform_1, window_bounds = array<i64: 128, 128>}, {pipeline_mode = #tpu.pipeline_mode<synchronous>, transform_indices = @transform_2, window_bounds = array<i64: 1, 128>}, {pipeline_mode = #tpu.pipeline_mode<synchronous>, transform_indices = @transform_3, window_bounds = array<i64: 128, 128>}, {pipeline_mode = #tpu.pipeline_mode<synchronous>, transform_indices = @transform_4, window_bounds = array<i64: 1, 128>}, {transform_indices = @transform_5, window_bounds = array<i64: 8, 256>}]} {
    %c0 = arith.constant 0 : index
    %c0_0 = arith.constant 0 : index
    %0 = vector.load %arg1[%c0, %c0_0] : memref<8x256xbf16, #tpu.memory_space<vmem>>, vector<8x128xbf16>
    %c0_1 = arith.constant 0 : index
    %c128 = arith.constant 128 : index
    %1 = vector.load %arg1[%c0_1, %c128] : memref<8x256xbf16, #tpu.memory_space<vmem>>, vector<8x128xbf16>
    %c0_2 = arith.constant 0 : index
    %c0_3 = arith.constant 0 : index
    %2 = vector.load %arg2[%c0_2, %c0_3] : memref<128x128xbf16, #tpu.memory_space<vmem>>, vector<128x128xbf16>
    %cst = arith.constant dense<0.000000e+00> : vector<8x128xf32>
    %3 = tpu.matmul %1, %2, %cst {dimension_numbers = #tpu.dot_dimension_numbers<[1], [0], [0], [1], [0, 0, 1, 1], [], []>} : vector<8x128xbf16>, vector<128x128xbf16>, vector<8x128xf32> -> vector<8x128xf32>
    %c0_4 = arith.constant 0 : index
    %c0_5 = arith.constant 0 : index
    %4 = vector.load %arg3[%c0_4, %c0_5] : memref<1x128xf32, #tpu.memory_space<vmem>>, vector<1x128xf32>
    %5 = vector.broadcast %4 : vector<1x128xf32> to vector<8x128xf32>
    %6 = arith.addf %3, %5 : vector<8x128xf32>
    %7 = arith.mulf %6, %6 : vector<8x128xf32>
    %8 = arith.mulf %6, %7 : vector<8x128xf32>
    %cst_6 = arith.constant 4.471500e-02 : f32
    %9 = vector.broadcast %cst_6 : f32 to vector<8x128xf32>
    %10 = arith.mulf %9, %8 : vector<8x128xf32>
    %11 = arith.addf %6, %10 : vector<8x128xf32>
    %cst_7 = arith.constant 0.797884583 : f32
    %12 = vector.broadcast %cst_7 : f32 to vector<8x128xf32>
    %13 = arith.mulf %12, %11 : vector<8x128xf32>
    %14 = math.tanh %13 : vector<8x128xf32>
    %cst_8 = arith.constant 1.000000e+00 : f32
    %15 = vector.broadcast %cst_8 : f32 to vector<8x128xf32>
    %16 = arith.addf %15, %14 : vector<8x128xf32>
    %cst_9 = arith.constant 5.000000e-01 : f32
    %17 = vector.broadcast %cst_9 : f32 to vector<8x128xf32>
    %18 = arith.mulf %17, %16 : vector<8x128xf32>
    %19 = arith.mulf %6, %18 : vector<8x128xf32>
    %20 = arith.extf %0 : vector<8x128xbf16> to vector<8x128xf32>
    %21 = arith.addf %20, %19 : vector<8x128xf32>
    %22 = arith.truncf %21 : vector<8x128xf32> to vector<8x128xbf16>
    %c0_10 = arith.constant 0 : index
    %c0_11 = arith.constant 0 : index
    %23 = vector.load %arg6[%c0_10, %c0_11] : memref<8x256xbf16, #tpu.memory_space<vmem>>, vector<8x128xbf16>
    tpu.vector_store %arg6[%c0_10, %c0_11], %22 {strides = array<i32>} : memref<8x256xbf16, #tpu.memory_space<vmem>>, vector<8x128xbf16>,
    %24 = arith.truncf %21 : vector<8x128xf32> to vector<8x128xbf16>
    %c0_12 = arith.constant 0 : index
    %c0_13 = arith.constant 0 : index
    %25 = vector.load %arg4[%c0_12, %c0_13] : memref<128x128xbf16, #tpu.memory_space<vmem>>, vector<128x128xbf16>
    %cst_14 = arith.constant dense<0.000000e+00> : vector<8x128xf32>
    %26 = tpu.matmul %24, %25, %cst_14 {dimension_numbers = #tpu.dot_dimension_numbers<[1], [0], [0], [1], [0, 0, 1, 1], [], []>} : vector<8x128xbf16>, vector<128x128xbf16>, vector<8x128xf32> -> vector<8x128xf32>
    %c0_15 = arith.constant 0 : index
    %c0_16 = arith.constant 0 : index
    %27 = vector.load %arg5[%c0_15, %c0_16] : memref<1x128xf32, #tpu.memory_space<vmem>>, vector<1x128xf32>
    %28 = vector.broadcast %27 : vector<1x128xf32> to vector<8x128xf32>
    %29 = arith.addf %26, %28 : vector<8x128xf32>
    %30 = arith.mulf %29, %29 : vector<8x128xf32>
    %31 = arith.mulf %29, %30 : vector<8x128xf32>
    %cst_17 = arith.constant 4.471500e-02 : f32
    %32 = vector.broadcast %cst_17 : f32 to vector<8x128xf32>
    %33 = arith.mulf %32, %31 : vector<8x128xf32>
    %34 = arith.addf %29, %33 : vector<8x128xf32>
    %cst_18 = arith.constant 0.797884583 : f32
    %35 = vector.broadcast %cst_18 : f32 to vector<8x128xf32>
    %36 = arith.mulf %35, %34 : vector<8x128xf32>
    %37 = math.tanh %36 : vector<8x128xf32>
    %cst_19 = arith.constant 1.000000e+00 : f32
    %38 = vector.broadcast %cst_19 : f32 to vector<8x128xf32>
    %39 = arith.addf %38, %37 : vector<8x128xf32>
    %cst_20 = arith.constant 5.000000e-01 : f32
    %40 = vector.broadcast %cst_20 : f32 to vector<8x128xf32>
    %41 = arith.mulf %40, %39 : vector<8x128xf32>
    %42 = arith.mulf %29, %41 : vector<8x128xf32>
    %43 = arith.extf %1 : vector<8x128xbf16> to vector<8x128xf32>
    %44 = arith.addf %43, %42 : vector<8x128xf32>
    %45 = arith.truncf %44 : vector<8x128xf32> to vector<8x128xbf16>
    %c0_21 = arith.constant 0 : index
    %c128_22 = arith.constant 128 : index
    %46 = vector.load %arg6[%c0_21, %c128_22] : memref<8x256xbf16, #tpu.memory_space<vmem>>, vector<8x128xbf16>
    tpu.vector_store %arg6[%c0_21, %c128_22], %45 {strides = array<i32>} : memref<8x256xbf16, #tpu.memory_space<vmem>>, vector<8x128xbf16>,
    return
  }
  func.func @transform_0(%arg0: i32) -> (i32, i32) {
    %c0_i32 = arith.constant 0 : i32
    %c0_i32_0 = arith.constant 0 : i32
    return %arg0, %c0_i32 : i32, i32
  }
  func.func @transform_1(%arg0: i32) -> (i32, i32) {
    %c0_i32 = arith.constant 0 : i32
    %c0_i32_0 = arith.constant 0 : i32
    %c0_i32_1 = arith.constant 0 : i32
    return %c0_i32, %c0_i32_0 : i32, i32
  }
  func.func @transform_2(%arg0: i32) -> (i32, i32) {
    %c0_i32 = arith.constant 0 : i32
    %c0_i32_0 = arith.constant 0 : i32
    %c0_i32_1 = arith.constant 0 : i32
    return %c0_i32, %c0_i32_0 : i32, i32
  }
  func.func @transform_3(%arg0: i32) -> (i32, i32) {
    %c0_i32 = arith.constant 0 : i32
    %c0_i32_0 = arith.constant 0 : i32
    %c0_i32_1 = arith.constant 0 : i32
    return %c0_i32, %c0_i32_0 : i32, i32
  }
  func.func @transform_4(%arg0: i32) -> (i32, i32) {
    %c0_i32 = arith.constant 0 : i32
    %c0_i32_0 = arith.constant 0 : i32
    %c0_i32_1 = arith.constant 0 : i32
    return %c0_i32, %c0_i32_0 : i32, i32
  }
  func.func @transform_5(%arg0: i32) -> (i32, i32) {
    %c0_i32 = arith.constant 0 : i32
    %c0_i32_0 = arith.constant 0 : i32
    return %arg0, %c0_i32 : i32, i32
  }
}

</mosaic_0001>

<llo_original>
// kernel: tpu_custom_call.1
$region0: #{tpu_custom_call.1}
  #allocation0 [shape = 'u32[]', space=smem, size = 0x4, offset = 0x4, fixed_abs, tag = 'smem constant byte address 0x4 - core index']
  #allocation1 [shape = 'u32[144,128]{1,0:T(1,128)}', space=vmem, size = 0x12000, scoped, tag = 'internal scratch']
  %s0 = inlined_call_operand.hbm [shape: bf16[16,256], index: 0, kind: input, shape index: {}]
  %s1 = inlined_call_operand.hbm [shape: bf16[128,128], index: 1, kind: input, shape index: {}]
  %s2 = inlined_call_operand.vmem [shape: f32[1,128], index: 2, kind: input, shape index: {}]
  %s3 = inlined_call_operand.hbm [shape: bf16[128,128], index: 3, kind: input, shape index: {}]
  %s4 = inlined_call_operand.vmem [shape: f32[1,128], index: 4, kind: input, shape index: {}]
  %s5 = inlined_call_operand.hbm [shape: bf16[16,256], index: 5, kind: output, shape index: {}]
  %s6 = sld [smem:[#allocation0]]
  $region65: #{tpu_custom_call.1} parent=0
    _
  %s8 = ssub.s32 1, %s6
  %s9 = scalar_select 0, %s8, %s6
  $region1: #{tpu_custom_call.1} parent=0
    #allocation2 [shape = 'u8[8192]{0}', space=vmem, size = 0x2000, scoped, tag = 'input window, operand 0']
    #allocation3 [shape = 's32[2]{0}', space=sflag, size = 0x8, scoped, tag = 'scoped memory for tpu_custom_call.1']
    #allocation4 [shape = 's32[2]{0}', space=sflag, size = 0x8, scoped, tag = 'scoped memory for tpu_custom_call.1']
    #allocation5 [shape = 'u8[32768]{0}', space=vmem, size = 0x8000, scoped, tag = 'input window, operand 1, single buffered']
    #allocation6 [shape = 's32[1]{0}', space=sflag, size = 0x4, scoped, tag = 'scoped memory for tpu_custom_call.1']
    #allocation7 [shape = 'u8[32768]{0}', space=vmem, size = 0x8000, scoped, tag = 'input window, operand 3, single buffered']
    #allocation8 [shape = 'u8[8192]{0}', space=vmem, size = 0x2000, scoped, tag = 'output window, operand 0']
    %10 = vsyncpa [#allocation3], 0
    %s11 = scalar_lea.sflag [#allocation3], 1
    %12 = vsyncpa %s11, 0
    %13 = vsyncpa [#allocation6], 0
    %14 = vsyncpa [#allocation4], 0
    %s15 = scalar_lea.sflag [#allocation4], 1
    %16 = vsyncpa %s15, 0
    loop: start=0, step=1, limit=4
    $region2: #{tpu_custom_call.1} parent=1 // loop_pre_header
      _
    $region3: #{tpu_custom_call.1} parent=1 // loop_header
      %s18 = sphi 0, %s22
      %p19 = scmp.ge.s32.totalorder %s18, 4
      %s28 = sphi 0, %s30
      %s31 = sphi 0, %s28
      %s32 = sphi 0, %s31
      %s48 = sphi 0, %s32
      %s52 = sphi 0, %s52
      %s54 = sphi 0, %s52
      %s55 = sphi 0, %s54
      %s69 = sphi 0, %s55
      %s73 = sphi 0, %s73
      %s75 = sphi 0, %s73
      %s76 = sphi 0, %s75
      %s90 = sphi 0, %s76
      %s94 = sphi 0, %s94
      %s96 = sphi 0, %s94
      %s97 = sphi 0, %s96
      %s111 = sphi 0, %s97
      %s115 = sphi 0, %s115
      %s117 = sphi 0, %s115
      %s118 = sphi 0, %s117
      %s132 = sphi 0, %s118
      %s138 = sphi 0, %s140
      %s141 = sphi 0, %s138
      %s142 = sphi 0, %s141
      %s158 = sphi 0, %s142
    $region4: #{tpu_custom_call.1} parent=1 // loop_header_branch
      %21 = sbr.rel (%p19) target = $region8
    $region5: #{tpu_custom_call.1} parent=1 // loop_body
      %s23 = ssub.s32 %s18, 1
      %s24 = ssub.s32 %s18, 2
      %s25 = sadd.s32 %s18, 1
      %s26 = ssub.s32 %s18, %s25
      %p27 = scmp.eq.s32.totalorder %s26, 0
      %s29 = sadd.s32 %s28, 1
      %s30 = scalar_select %p27, %s28, %s29
      %p33 = pneg %p27
      %p34 = scmp.eq.s32.totalorder %s18, 1
      %p35 = por %p33, %p34
      %p36 = scmp.ne.s32.totalorder %s28, %s31
      %p37 = scmp.eq.s32.totalorder %s18, 0
      %p38 = por %p36, %p37
      %p39 = scmp.ne.s32.totalorder %s28, %s31
      %p40 = scmp.eq.s32.totalorder %s23, 1
      %p41 = por %p39, %p40
      %p42 = scmp.ne.s32.totalorder %s31, %s32
      %p43 = scmp.eq.s32.totalorder %s23, 0
      %p44 = por %p42, %p43
      %p45 = scmp.ne.s32.totalorder %s31, %s32
      %p46 = scmp.eq.s32.totalorder %s24, 1
      %p47 = por %p45, %p46
      %p49 = scmp.ne.s32.totalorder %s32, %s48
      %p50 = scmp.eq.s32.totalorder %s24, 0
      %p51 = por %p49, %p50
      %s53 = sadd.s32 %s52, 1
      %p56 = scmp.eq.s32.totalorder %s18, 1
      %p57 = scmp.ne.s32.totalorder %s52, %s54
      %p58 = scmp.eq.s32.totalorder %s18, 0
      %p59 = por %p57, %p58
      %p60 = scmp.ne.s32.totalorder %s52, %s54
      %p61 = scmp.eq.s32.totalorder %s23, 1
      %p62 = por %p60, %p61
      %p63 = scmp.ne.s32.totalorder %s54, %s55
      %p64 = scmp.eq.s32.totalorder %s23, 0
      %p65 = por %p63, %p64
      %p66 = scmp.ne.s32.totalorder %s54, %s55
      %p67 = scmp.eq.s32.totalorder %s24, 1
      %p68 = por %p66, %p67
      %p70 = scmp.ne.s32.totalorder %s55, %s69
      %p71 = scmp.eq.s32.totalorder %s24, 0
      %p72 = por %p70, %p71
      %s74 = sadd.s32 %s73, 1
      %p77 = scmp.eq.s32.totalorder %s18, 1
      %p78 = scmp.ne.s32.totalorder %s73, %s75
      %p79 = scmp.eq.s32.totalorder %s18, 0
      %p80 = por %p78, %p79
      %p81 = scmp.ne.s32.totalorder %s73, %s75
      %p82 = scmp.eq.s32.totalorder %s23, 1
      %p83 = por %p81, %p82
      %p84 = scmp.ne.s32.totalorder %s75, %s76
      %p85 = scmp.eq.s32.totalorder %s23, 0
      %p86 = por %p84, %p85
      %p87 = scmp.ne.s32.totalorder %s75, %s76
      %p88 = scmp.eq.s32.totalorder %s24, 1
      %p89 = por %p87, %p88
      %p91 = scmp.ne.s32.totalorder %s76, %s90
      %p92 = scmp.eq.s32.totalorder %s24, 0
      %p93 = por %p91, %p92
      %s95 = sadd.s32 %s94, 1
      %p98 = scmp.eq.s32.totalorder %s18, 1
      %p99 = scmp.ne.s32.totalorder %s94, %s96
      %p100 = scmp.eq.s32.totalorder %s18, 0
      %p101 = por %p99, %p100
      %p102 = scmp.ne.s32.totalorder %s94, %s96
      %p103 = scmp.eq.s32.totalorder %s23, 1
      %p104 = por %p102, %p103
      %p105 = scmp.ne.s32.totalorder %s96, %s97
      %p106 = scmp.eq.s32.totalorder %s23, 0
      %p107 = por %p105, %p106
      %p108 = scmp.ne.s32.totalorder %s96, %s97
      %p109 = scmp.eq.s32.totalorder %s24, 1
      %p110 = por %p108, %p109
      %p112 = scmp.ne.s32.totalorder %s97, %s111
      %p113 = scmp.eq.s32.totalorder %s24, 0
      %p114 = por %p112, %p113
      %s116 = sadd.s32 %s115, 1
      %p119 = scmp.eq.s32.totalorder %s18, 1
      %p120 = scmp.ne.s32.totalorder %s115, %s117
      %p121 = scmp.eq.s32.totalorder %s18, 0
      %p122 = por %p120, %p121
      %p123 = scmp.ne.s32.totalorder %s115, %s117
      %p124 = scmp.eq.s32.totalorder %s23, 1
      %p125 = por %p123, %p124
      %p126 = scmp.ne.s32.totalorder %s117, %s118
      %p127 = scmp.eq.s32.totalorder %s23, 0
      %p128 = por %p126, %p127
      %p129 = scmp.ne.s32.totalorder %s117, %s118
      %p130 = scmp.eq.s32.totalorder %s24, 1
      %p131 = por %p129, %p130
      %p133 = scmp.ne.s32.totalorder %s118, %s132
      %p134 = scmp.eq.s32.totalorder %s24, 0
      %p135 = por %p133, %p134
      %s136 = ssub.s32 %s18, %s25
      %p137 = scmp.eq.s32.totalorder %s136, 0
      %s139 = sadd.s32 %s138, 1
      %s140 = scalar_select %p137, %s138, %s139
      %p143 = pneg %p137
      %p144 = scmp.eq.s32.totalorder %s18, 1
      %p145 = por %p143, %p144
      %p146 = scmp.ne.s32.totalorder %s138, %s141
      %p147 = scmp.eq.s32.totalorder %s18, 0
      %p148 = por %p146, %p147
      %p149 = scmp.ne.s32.totalorder %s138, %s141
      %p150 = scmp.eq.s32.totalorder %s23, 1
      %p151 = por %p149, %p150
      %p152 = scmp.ne.s32.totalorder %s141, %s142
      %p153 = scmp.eq.s32.totalorder %s23, 0
      %p154 = por %p152, %p153
      %p155 = scmp.ne.s32.totalorder %s141, %s142
      %p156 = scmp.eq.s32.totalorder %s24, 1
      %p157 = por %p155, %p156
      %p159 = scmp.ne.s32.totalorder %s142, %s158
      %p160 = scmp.eq.s32.totalorder %s24, 0
      %p161 = por %p159, %p160
      %p162 = scmp.le.s32.totalorder 1, %s18
      %p163 = scmp.lt.s32.totalorder %s18, 3
      %p164 = pnand %p162, %p163
      %p165 = pneg %p164
      // Predicated region
      $region9: #{tpu_custom_call.1} parent=5 // pred_check
        _
      $region10: #{tpu_custom_call.1} parent=5 // pred_check_branch
        %167 = sbr.rel (%p164) target = $region12
      $region11: #{tpu_custom_call.1} parent=5 // pred_region
        %s168 = ssub.s32 %s18, 1
        // Predicated region
        $region13: #{tpu_custom_call.1} parent=11 // pred_check
          %p169 = pneg %p65
        $region14: #{tpu_custom_call.1} parent=11 // pred_check_branch
          %171 = sbr.rel (%p169) target = $region16
        $region15: #{tpu_custom_call.1} parent=11 // pred_region
          %s173 = ssub.s32 1024, 1024
          %174 = vsyncadd [#allocation6], %s173
          %s175 = sshll.u32 [#allocation5], 4
          %s176 = int_to_ptr.vmem [resolvable:$true] %s175
          %181 = dma.hbm_to_vmem [thread:$0]  %s1, 1024, %s176, [#allocation6], 64, 64, 4
        $region16: #{tpu_custom_call.1} parent=11 // pred_fallthru
          _
        // Predicated region
        $region17: #{tpu_custom_call.1} parent=11 // pred_check
          %p182 = pneg %p86
        $region18: #{tpu_custom_call.1} parent=11 // pred_check_branch
          %184 = sbr.rel (%p182) target = $region20
        $region19: #{tpu_custom_call.1} parent=11 // pred_region
          _
        $region20: #{tpu_custom_call.1} parent=11 // pred_fallthru
          _
        // Predicated region
        $region21: #{tpu_custom_call.1} parent=11 // pred_check
          %p185 = pneg %p107
        $region22: #{tpu_custom_call.1} parent=11 // pred_check_branch
          %187 = sbr.rel (%p185) target = $region24
        $region23: #{tpu_custom_call.1} parent=11 // pred_region
          %s189 = ssub.s32 1024, 1024
          %190 = vsyncadd [#allocation6], %s189
          %s191 = sshll.u32 [#allocation7], 4
          %s192 = int_to_ptr.vmem [resolvable:$true] %s191
          %197 = dma.hbm_to_vmem [thread:$0]  %s3, 1024, %s192, [#allocation6], 64, 64, 4
        $region24: #{tpu_custom_call.1} parent=11 // pred_fallthru
          _
        // Predicated region
        $region25: #{tpu_custom_call.1} parent=11 // pred_check
          %p198 = pneg %p128
        $region26: #{tpu_custom_call.1} parent=11 // pred_check_branch
          %200 = sbr.rel (%p198) target = $region28
        $region27: #{tpu_custom_call.1} parent=11 // pred_region
          _
        $region28: #{tpu_custom_call.1} parent=11 // pred_fallthru
          _
      $region12: #{tpu_custom_call.1} parent=5 // pred_fallthru
        _
      %p201 = scmp.lt.s32.totalorder %s18, 2
      // Predicated region
      $region29: #{tpu_custom_call.1} parent=5 // pred_check
        %p202 = pneg %p201
      $region30: #{tpu_custom_call.1} parent=5 // pred_check_branch
        %204 = sbr.rel (%p202) target = $region32
      $region31: #{tpu_custom_call.1} parent=5 // pred_region
        // Predicated region
        $region33: #{tpu_custom_call.1} parent=31 // pred_check
          %p205 = pneg %p38
        $region34: #{tpu_custom_call.1} parent=31 // pred_check_branch
          %207 = sbr.rel (%p205) target = $region36
        $region35: #{tpu_custom_call.1} parent=31 // pred_region
          %s208 = sand.u32 %s28, 1
          %s209 = scalar_lea.sflag [#allocation3], %s208
          %s210 = sand.u32 %s28, 1
          %s211 = smul.addr %s210, 8
          %s212 = scalar_lea.vmem [#allocation2], %s211
          %s214 = ssub.s32 128, 128
          %215 = vsyncadd %s209, %s214
          %s216 = smul.addr %s18, 2
          %s217 = smul.addr %s216, 64
          %s218 = scalar_lea.hbm %s0, %s217
          %s220 = sshll.u32 %s212, 4
          %s221 = int_to_ptr.vmem [resolvable:$true] %s220
          %223 = dma.hbm_to_vmem [thread:$0]  %s218, 128, %s221, %s209
        $region36: #{tpu_custom_call.1} parent=31 // pred_fallthru
          _
      $region32: #{tpu_custom_call.1} parent=5 // pred_fallthru
        _
      %p224 = scmp.le.s32.totalorder 1, %s18
      %p225 = scmp.lt.s32.totalorder %s18, 3
      %p226 = pnand %p224, %p225
      %p227 = pneg %p226
      // Predicated region
      $region37: #{tpu_custom_call.1} parent=5 // pred_check
        _
      $region38: #{tpu_custom_call.1} parent=5 // pred_check_branch
        %229 = sbr.rel (%p226) target = $region40
      $region39: #{tpu_custom_call.1} parent=5 // pred_region
        %s230 = ssub.s32 %s18, 1
        %s231 = sand.u32 %s31, 1
        %s232 = scalar_lea.sflag [#allocation3], %s231
        %s233 = sand.u32 %s31, 1
        %s234 = smul.addr %s233, 8
        %s235 = scalar_lea.vmem [#allocation2], %s234
        // Predicated region
        $region41: #{tpu_custom_call.1} parent=39 // pred_check
          %p236 = pneg %p44
        $region42: #{tpu_custom_call.1} parent=39 // pred_check_branch
          %238 = sbr.rel (%p236) target = $region44
        $region43: #{tpu_custom_call.1} parent=39 // pred_region
          %239 = dma.done %s232, 128
        $region44: #{tpu_custom_call.1} parent=39 // pred_fallthru
          _
        // Predicated region
        $region45: #{tpu_custom_call.1} parent=39 // pred_check
          %p240 = pneg %p65
        $region46: #{tpu_custom_call.1} parent=39 // pred_check_branch
          %242 = sbr.rel (%p240) target = $region48
        $region47: #{tpu_custom_call.1} parent=39 // pred_region
          %243 = dma.done [#allocation6], 1024
        $region48: #{tpu_custom_call.1} parent=39 // pred_fallthru
          _
        // Predicated region
        $region49: #{tpu_custom_call.1} parent=39 // pred_check
          %p244 = pneg %p107
        $region50: #{tpu_custom_call.1} parent=39 // pred_check_branch
          %246 = sbr.rel (%p244) target = $region52
        $region51: #{tpu_custom_call.1} parent=39 // pred_region
          %247 = dma.done [#allocation6], 1024
        $region52: #{tpu_custom_call.1} parent=39 // pred_fallthru
          _
        %s248 = sand.u32 %s31, 1
        %s249 = scalar_lea.sflag [#allocation3], %s248
        %s250 = sand.u32 %s31, 1
        %s251 = smul.addr %s250, 8
        %s252 = scalar_lea.vmem [#allocation2], %s251
        %p253 = pneg %p44
        %p254 = pneg %p41
        %p255 = pneg %p65
        %p256 = pneg %p62
        %p257 = pneg %p86
        %p258 = pneg %p83
        %p259 = pneg %p107
        %p260 = pneg %p104
        %p261 = pneg %p128
        %p262 = pneg %p125
        %p263 = pneg %p154
        %p264 = pneg %p151
        %s265 = sand.u32 %s141, 1
        %s266 = scalar_lea.sflag [#allocation4], %s265
        %s267 = sand.u32 %s141, 1
        %s268 = smul.addr %s267, 8
        %s269 = scalar_lea.vmem [#allocation8], %s268
        %v271 = vld [vmem:[%s235] sm:$0xf]
        %v272 = vld [vmem:[%s235 + $0x4] sm:$0xf]
        %v273 = vld [vmem:[#allocation5] sm:$0xf]
        %v274 = vld [vmem:[#allocation5 + $0x4] sm:$0xf]
        %v275 = vld [vmem:[#allocation5 + $0x8] sm:$0xf]
        %v276 = vld [vmem:[#allocation5 + $0xc] sm:$0xf]
        %v277 = vld [vmem:[#allocation5 + $0x10] sm:$0xf]
        %v278 = vld [vmem:[#allocation5 + $0x14] sm:$0xf]
        %v279 = vld [vmem:[#allocation5 + $0x18] sm:$0xf]
        %v280 = vld [vmem:[#allocation5 + $0x1c] sm:$0xf]
        %v281 = vld [vmem:[#allocation5 + $0x20] sm:$0xf]
        %v282 = vld [vmem:[#allocation5 + $0x24] sm:$0xf]
        %v283 = vld [vmem:[#allocation5 + $0x28] sm:$0xf]
        %v284 = vld [vmem:[#allocation5 + $0x2c] sm:$0xf]
        %v285 = vld [vmem:[#allocation5 + $0x30] sm:$0xf]
        %v286 = vld [vmem:[#allocation5 + $0x34] sm:$0xf]
        %v287 = vld [vmem:[#allocation5 + $0x38] sm:$0xf]
        %v288 = vld [vmem:[#allocation5 + $0x3c] sm:$0xf]
        %v289 = vld [vmem:[%s2] sm:$0x1]
        %v291 = vlaneseq
        %v292 = vshrl.u32 %v291, 7
        %v293 = vsub.s32 0, %v292
        %v294 = vrot.slane %v289, %v293
        %v312 = vunpack.c.l.b16 %v273
        %v313 = vunpack.c.l.b16 %v274
        %v314 = vunpack.c.l.b16 %v275
        %v315 = vunpack.c.l.b16 %v276
        %v316 = vunpack.c.l.b16 %v277
        %v317 = vunpack.c.l.b16 %v278
        %v318 = vunpack.c.l.b16 %v279
        %v319 = vunpack.c.l.b16 %v280
        %v320 = vunpack.c.l.b16 %v281
        %v321 = vunpack.c.l.b16 %v282
        %v322 = vunpack.c.l.b16 %v283
        %v323 = vunpack.c.l.b16 %v284
        %v324 = vunpack.c.l.b16 %v285
        %v325 = vunpack.c.l.b16 %v286
        %v326 = vunpack.c.l.b16 %v287
        %v327 = vunpack.c.l.b16 %v288
        %v328 = vpack.c.b16 %v313, %v312
        %v329 = vpack.c.b16 %v315, %v314
        %v330 = vpack.c.b16 %v317, %v316
        %v331 = vpack.c.b16 %v319, %v318
        %v332 = vpack.c.b16 %v321, %v320
        %v333 = vpack.c.b16 %v323, %v322
        %v334 = vpack.c.b16 %v325, %v324
        %v335 = vpack.c.b16 %v327, %v326
        %344 = vmatprep.subr.bf16.mxu0 0
        %345 = vmatpush1.bf16.msra.mxu0 %v328
        %346 = vmatprep.subr.bf16.mxu0 0
        %347 = vmatpush1.bf16.msra.mxu0 %v329
        %348 = vmatprep.subr.bf16.mxu0 0
        %349 = vmatpush1.bf16.msra.mxu0 %v330
        %350 = vmatprep.subr.bf16.mxu0 0
        %351 = vmatpush1.bf16.msra.mxu0 %v331
        %352 = vmatprep.subr.bf16.mxu0 0
        %353 = vmatpush1.bf16.msra.mxu0 %v332
        %354 = vmatprep.subr.bf16.mxu0 0
        %355 = vmatpush1.bf16.msra.mxu0 %v333
        %356 = vmatprep.subr.bf16.mxu0 0
        %357 = vmatpush1.bf16.msra.mxu0 %v334
        %358 = vmatprep.subr.bf16.mxu0 0
        %359 = vmatpush1.bf16.msra.mxu0 %v335
        %360 = vmatprep.subr.bf16.mxu0 0
        %361 = vmatpush1.bf16.msra.mxu0 0
        %362 = vmatprep.subr.bf16.mxu0 0
        %363 = vmatpush1.bf16.msra.mxu0 0
        %364 = vmatprep.subr.bf16.mxu0 0
        %365 = vmatpush1.bf16.msra.mxu0 0
        %366 = vmatprep.subr.bf16.mxu0 0
        %367 = vmatpush1.bf16.msra.mxu0 0
        %368 = vmatprep.subr.bf16.mxu0 0
        %369 = vmatpush1.bf16.msra.mxu0 0
        %370 = vmatprep.subr.bf16.mxu0 0
        %371 = vmatpush1.bf16.msra.mxu0 0
        %372 = vmatprep.subr.bf16.mxu0 0
        %373 = vmatpush1.bf16.msra.mxu0 0
        %374 = vmatprep.subr.bf16.mxu0 0
        %375 = vmatpush1.bf16.msra.mxu0 0
        %376 = vmatprep.mubr.bf16.mxu0 0
        %377 = vmatmul.mubr.bf16.gmra.mrb[0].mxu0 %v272
        %v378 = vpop.f32.mrb[0].mxu0
        %v379 = vadd.f32 %v294, %v378
        %v380 = vpop.f32.mrb[0].mxu0
        %v381 = vpop.f32.mrb[0].mxu0
        %v382 = vpop.f32.mrb[0].mxu0
        %383 = vdwg.mxu0
        %v384 = vmul.f32 %v379, %v379
        %v385 = vmul.f32 %v379, %v384
        %v386 = vmul.f32 %v385, 0.044715
        %v387 = vadd.f32 %v379, %v386
        %v388 = vmul.f32 %v387, 0.7978846
        %v389 = vtanh.pop %v388
        %v390 = vadd.f32 %v389, 1.0
        %v391 = vmul.f32 %v390, 0.5
        %v392 = vmul.f32 %v379, %v391
        %v393 = vunpack.c.l.bf16 %v271
        %v394 = vadd.f32 %v393, %v392
        %v395 = vpack.c.bf16 %v394, %v394
        %396 = vst [vmem:[%s269] sm:$0xf] %v395
        %v397 = vld [vmem:[#allocation7] sm:$0xf]
        %v398 = vld [vmem:[#allocation7 + $0x4] sm:$0xf]
        %v399 = vld [vmem:[#allocation7 + $0x8] sm:$0xf]
        %v400 = vld [vmem:[#allocation7 + $0xc] sm:$0xf]
        %v401 = vld [vmem:[#allocation7 + $0x10] sm:$0xf]
        %v402 = vld [vmem:[#allocation7 + $0x14] sm:$0xf]
        %v403 = vld [vmem:[#allocation7 + $0x18] sm:$0xf]
        %v404 = vld [vmem:[#allocation7 + $0x1c] sm:$0xf]
        %v405 = vld [vmem:[#allocation7 + $0x20] sm:$0xf]
        %v406 = vld [vmem:[#allocation7 + $0x24] sm:$0xf]
        %v407 = vld [vmem:[#allocation7 + $0x28] sm:$0xf]
        %v408 = vld [vmem:[#allocation7 + $0x2c] sm:$0xf]
        %v409 = vld [vmem:[#allocation7 + $0x30] sm:$0xf]
        %v410 = vld [vmem:[#allocation7 + $0x34] sm:$0xf]
        %v411 = vld [vmem:[#allocation7 + $0x38] sm:$0xf]
        %v412 = vld [vmem:[#allocation7 + $0x3c] sm:$0xf]
        %v413 = vld [vmem:[%s4] sm:$0x1]
        %v415 = vlaneseq
        %v416 = vshrl.u32 %v415, 7
        %v417 = vsub.s32 0, %v416
        %v418 = vrot.slane %v413, %v417
        %v436 = vunpack.c.l.b16 %v397
        %v437 = vunpack.c.l.b16 %v398
        %v438 = vunpack.c.l.b16 %v399
        %v439 = vunpack.c.l.b16 %v400
        %v440 = vunpack.c.l.b16 %v401
        %v441 = vunpack.c.l.b16 %v402
        %v442 = vunpack.c.l.b16 %v403
        %v443 = vunpack.c.l.b16 %v404
        %v444 = vunpack.c.l.b16 %v405
        %v445 = vunpack.c.l.b16 %v406
        %v446 = vunpack.c.l.b16 %v407
        %v447 = vunpack.c.l.b16 %v408
        %v448 = vunpack.c.l.b16 %v409
        %v449 = vunpack.c.l.b16 %v410
        %v450 = vunpack.c.l.b16 %v411
        %v451 = vunpack.c.l.b16 %v412
        %v452 = vpack.c.b16 %v437, %v436
        %v453 = vpack.c.b16 %v439, %v438
        %v454 = vpack.c.b16 %v441, %v440
        %v455 = vpack.c.b16 %v443, %v442
        %v456 = vpack.c.b16 %v445, %v444
        %v457 = vpack.c.b16 %v447, %v446
        %v458 = vpack.c.b16 %v449, %v448
        %v459 = vpack.c.b16 %v451, %v450
        %468 = vmatprep.subr.bf16.mxu0 0
        %469 = vmatpush1.bf16.msra.mxu0 %v452
        %470 = vmatprep.subr.bf16.mxu0 0
        %471 = vmatpush1.bf16.msra.mxu0 %v453
        %472 = vmatprep.subr.bf16.mxu0 0
        %473 = vmatpush1.bf16.msra.mxu0 %v454
        %474 = vmatprep.subr.bf16.mxu0 0
        %475 = vmatpush1.bf16.msra.mxu0 %v455
        %476 = vmatprep.subr.bf16.mxu0 0
        %477 = vmatpush1.bf16.msra.mxu0 %v456
        %478 = vmatprep.subr.bf16.mxu0 0
        %479 = vmatpush1.bf16.msra.mxu0 %v457
        %480 = vmatprep.subr.bf16.mxu0 0
        %481 = vmatpush1.bf16.msra.mxu0 %v458
        %482 = vmatprep.subr.bf16.mxu0 0
        %483 = vmatpush1.bf16.msra.mxu0 %v459
        %484 = vmatprep.subr.bf16.mxu0 0
        %485 = vmatpush1.bf16.msra.mxu0 0
        %486 = vmatprep.subr.bf16.mxu0 0
        %487 = vmatpush1.bf16.msra.mxu0 0
        %488 = vmatprep.subr.bf16.mxu0 0
        %489 = vmatpush1.bf16.msra.mxu0 0
        %490 = vmatprep.subr.bf16.mxu0 0
        %491 = vmatpush1.bf16.msra.mxu0 0
        %492 = vmatprep.subr.bf16.mxu0 0
        %493 = vmatpush1.bf16.msra.mxu0 0
        %494 = vmatprep.subr.bf16.mxu0 0
        %495 = vmatpush1.bf16.msra.mxu0 0
        %496 = vmatprep.subr.bf16.mxu0 0
        %497 = vmatpush1.bf16.msra.mxu0 0
        %498 = vmatprep.subr.bf16.mxu0 0
        %499 = vmatpush1.bf16.msra.mxu0 0
        %500 = vmatprep.mubr.bf16.mxu0 0
        %501 = vmatmul.mubr.bf16.gmra.mrb[0].mxu0 %v395
        %v502 = vpop.f32.mrb[0].mxu0
        %v503 = vadd.f32 %v418, %v502
        %v504 = vpop.f32.mrb[0].mxu0
        %v505 = vpop.f32.mrb[0].mxu0
        %v506 = vpop.f32.mrb[0].mxu0
        %507 = vdwg.mxu0
        %v508 = vmul.f32 %v503, %v503
        %v509 = vmul.f32 %v503, %v508
        %v510 = vmul.f32 %v509, 0.044715
        %v511 = vadd.f32 %v503, %v510
        %v512 = vmul.f32 %v511, 0.7978846
        %v513 = vtanh.pop %v512
        %v514 = vadd.f32 %v513, 1.0
        %v515 = vmul.f32 %v514, 0.5
        %v516 = vmul.f32 %v503, %v515
        %v517 = vunpack.c.l.bf16 %v272
        %v518 = vadd.f32 %v517, %v516
        %v519 = vpack.c.bf16 %v518, %v518
        %520 = vst [vmem:[%s269 + $0x4] sm:$0xf] %v519
        %s521 = sand.u32 %s141, 1
        %s522 = scalar_lea.sflag [#allocation4], %s521
        %s523 = sand.u32 %s141, 1
        %s524 = smul.addr %s523, 8
        %s525 = scalar_lea.vmem [#allocation8], %s524
        // Predicated region
        $region53: #{tpu_custom_call.1} parent=39 // pred_check
          %p526 = pneg %p151
        $region54: #{tpu_custom_call.1} parent=39 // pred_check_branch
          %528 = sbr.rel (%p526) target = $region56
        $region55: #{tpu_custom_call.1} parent=39 // pred_region
          %s530 = ssub.s32 128, 128
          %531 = vsyncadd %s522, %s530
          %s532 = smul.addr %s23, 2
          %s533 = smul.addr %s532, 64
          %s534 = scalar_lea.hbm %s5, %s533
          %s536 = sshll.u32 %s525, 4
          %s537 = int_to_ptr.vmem [resolvable:$true] %s536
          %539 = dma.vmem_to_hbm [thread:$0]  %s537, 128, %s534, %s522
        $region56: #{tpu_custom_call.1} parent=39 // pred_fallthru
          _
      $region40: #{tpu_custom_call.1} parent=5 // pred_fallthru
        _
      %p540 = scmp.le.s32.totalorder 2, %s18
      // Predicated region
      $region57: #{tpu_custom_call.1} parent=5 // pred_check
        %p541 = pneg %p540
      $region58: #{tpu_custom_call.1} parent=5 // pred_check_branch
        %543 = sbr.rel (%p541) target = $region60
      $region59: #{tpu_custom_call.1} parent=5 // pred_region
        %s544 = ssub.s32 %s18, 2
        // Predicated region
        $region61: #{tpu_custom_call.1} parent=59 // pred_check
          %p545 = pneg %p157
        $region62: #{tpu_custom_call.1} parent=59 // pred_check_branch
          %547 = sbr.rel (%p545) target = $region64
        $region63: #{tpu_custom_call.1} parent=59 // pred_region
          %s548 = sand.u32 %s142, 1
          %s549 = scalar_lea.sflag [#allocation4], %s548
          %s550 = sand.u32 %s142, 1
          %s551 = smul.addr %s550, 8
          %s552 = scalar_lea.vmem [#allocation8], %s551
          %553 = dma.done %s549, 128
        $region64: #{tpu_custom_call.1} parent=59 // pred_fallthru
          _
      $region60: #{tpu_custom_call.1} parent=5 // pred_fallthru
        _
    $region6: #{tpu_custom_call.1} parent=1 // loop_footer
      %s22 = sadd.s32 1, %s18
    $region7: #{tpu_custom_call.1} parent=1 // loop_footer_branch
      %17 = sbr.rel target = $region3
    $region8: #{tpu_custom_call.1} parent=1 // loop_exit
      _
    %554 = vsyncpa [#allocation3], 1
    %s555 = scalar_lea.sflag [#allocation3], 1
    %556 = vsyncpa %s555, 1
    %557 = vsyncpa [#allocation6], 1
    %558 = vsyncpa [#allocation4], 1
    %s559 = scalar_lea.sflag [#allocation4], 1
    %560 = vsyncpa %s559, 1

</llo_original>
